<compile_context>
chip_gen: v6e
topology: v6e:2x2x1
jax: 0.10.0
libtpu: 0.0.40
codegen_flags: <defaults>
</compile_context>

<pallas_src>
import jax
import jax.numpy as jnp
from jax.experimental import pallas as pl
from jax.experimental.pallas import tpu as pltpu

_TWO_PI = 6.283185307179586
_COLS = 512            # lane-dense output width (multiple of 128)
_HALF = _COLS // 2     # each (u1, u2) pair produces 2 outputs -> bits are half-width


def _noise_kernel(alpha_ref, u1_ref, u2_ref, o_ref):
    """Box-Muller (both branches) on externally supplied uniform bits, scaled by alpha/3."""
    inv24 = jnp.float32(1.0 / (1 << 24))
    # Top 24 bits -> uniforms: u1 in (2^-24, 1] (safe for log), u2 in [0, 1).
    u1 = 1.0 - (u1_ref[...] >> 8).astype(jnp.float32) * inv24
    u2 = (u2_ref[...] >> 8).astype(jnp.float32) * inv24

    r = jnp.sqrt(-2.0 * jnp.log(u1))
    theta = _TWO_PI * u2
    scale = alpha_ref[0] * jnp.float32(1.0 / 3.0)

    # Two independent standard normals per (u1, u2) pair; each half is 256 lanes
    # (multiple of 128) -> unmasked vector stores.
    o_ref[:, :_HALF] = (r * jnp.cos(theta) * scale).astype(o_ref.dtype)
    o_ref[:, _HALF:] = (r * jnp.sin(theta) * scale).astype(o_ref.dtype)


def noise_forward(f, alpha, key):
    """JAX/Pallas equivalent of Noise.forward(f) = randn_like(f) * alpha / 3."""
    B, C, H, W = f.shape
    total = B * C * H * W

    # Lane-dense slab: rows x 512, padded so the row tile divides evenly.
    rows = pl.cdiv(total, _COLS)
    tr = 256 if rows >= 256 else max(8, ((rows + 7) // 8) * 8)
    rows_padded = ((rows + tr - 1) // tr) * tr
    grid = (rows_padded // tr,)

    k1, k2 = jax.random.split(key)
    u1_bits = jax.random.bits(k1, (rows_padded, _HALF), dtype=jnp.uint32)
    u2_bits = jax.random.bits(k2, (rows_padded, _HALF), dtype=jnp.uint32)
    alpha_arr = jnp.asarray(alpha, dtype=jnp.float32).reshape(1)

    out_bytes = rows_padded * _COLS * jnp.dtype(f.dtype).itemsize
    in_bytes = 2 * rows_padded * _HALF * 4
    cost = pl.CostEstimate(
        flops=8 * rows_padded * _COLS,
        transcendentals=4 * rows_padded * _HALF,   # log, sqrt, cos, sin per pair
        bytes_accessed=out_bytes + in_bytes,
    )

    out2d = pl.pallas_call(
        _noise_kernel,
        out_shape=jax.ShapeDtypeStruct((rows_padded, _COLS), f.dtype),
        grid=grid,
        in_specs=[
            pl.BlockSpec(memory_space=pltpu.MemorySpace.SMEM),   # alpha (scalar)
            pl.BlockSpec((tr, _HALF), lambda i: (i, 0)),         # u1 bits
            pl.BlockSpec((tr, _HALF), lambda i: (i, 0)),         # u2 bits
        ],
        out_specs=pl.BlockSpec((tr, _COLS), lambda i: (i, 0)),
        compiler_params=pltpu.CompilerParams(
            dimension_semantics=("parallel",)),
        cost_estimate=cost,
    )(alpha_arr, u1_bits, u2_bits)

    # Drop padding and restore NCHW.
    return out2d.reshape(-1)[:total].reshape(B, C, H, W)


if __name__ == "__main__":
    key = jax.random.PRNGKey(0)
    k_data, k_noise = jax.random.split(key)

    # Small NCHW input consistent with the module's forward (values are ignored,
    # only shape/dtype matter — mirrors randn_like).
    f = jax.random.normal(k_data, (2, 4, 16, 16), dtype=jnp.float32)

    # Deterministic parameter init, matching nn.Parameter(0.1 * torch.ones(1)).
    alpha = jnp.full((1,), 0.1, dtype=jnp.float32)

    out = noise_forward(f, alpha, k_noise)
    out = jax.block_until_ready(out)

    assert out.shape == f.shape and out.dtype == f.dtype
    assert bool(jnp.all(jnp.isfinite(out)))
    # Sanity: noise should have std ~= 0.1 / 3 ~= 0.0333.
    std = float(jnp.std(out))
    assert 0.02 < std < 0.05, f"unexpected noise std {std}"

    print("KERNEL_OK")
</pallas_src>

<mosaic_0001>
module attributes {stable_mosaic.version = 11 : i64} {
  func.func @_noise_kernel(%arg0: i32, %arg1: memref<1xf32, #tpu.memory_space<smem>>, %arg2: memref<8x256xi32, #tpu.memory_space<vmem>>, %arg3: memref<8x256xi32, #tpu.memory_space<vmem>>, %arg4: memref<8x512xf32, #tpu.memory_space<vmem>>) attributes {dimension_semantics = [#tpu.dimension_semantics<parallel>], iteration_bounds = array<i64: 1>, scalar_prefetch = 0 : i64, scratch_operands = 0 : i64, tpu.core_type = #tpu.core_type<tc>, window_params = [{transform_indices = @transform_0, window_bounds = array<i64: 1>}, {transform_indices = @transform_1, window_bounds = array<i64: 8, 256>}, {transform_indices = @transform_2, window_bounds = array<i64: 8, 256>}, {transform_indices = @transform_3, window_bounds = array<i64: 8, 512>}]} {
    %c0 = arith.constant 0 : index
    %c0_0 = arith.constant 0 : index
    %0 = vector.load %arg2[%c0, %c0_0] : memref<8x256xi32, #tpu.memory_space<vmem>>, vector<8x256xi32>
    %c8_i32 = arith.constant 8 : i32
    %1 = vector.broadcast %c8_i32 : i32 to vector<8x256xi32>
    %2 = arith.shrui %0, %1 : vector<8x256xi32>
    %3 = arith.uitofp %2 : vector<8x256xi32> to vector<8x256xf32>
    %cst = arith.constant 5.96046448E-8 : f32
    %4 = vector.broadcast %cst : f32 to vector<8x256xf32>
    %5 = arith.mulf %3, %4 : vector<8x256xf32>
    %cst_1 = arith.constant 1.000000e+00 : f32
    %6 = vector.broadcast %cst_1 : f32 to vector<8x256xf32>
    %7 = arith.subf %6, %5 : vector<8x256xf32>
    %c0_2 = arith.constant 0 : index
    %c0_3 = arith.constant 0 : index
    %8 = vector.load %arg3[%c0_2, %c0_3] : memref<8x256xi32, #tpu.memory_space<vmem>>, vector<8x256xi32>
    %c8_i32_4 = arith.constant 8 : i32
    %9 = vector.broadcast %c8_i32_4 : i32 to vector<8x256xi32>
    %10 = arith.shrui %8, %9 : vector<8x256xi32>
    %11 = arith.uitofp %10 : vector<8x256xi32> to vector<8x256xf32>
    %cst_5 = arith.constant 5.96046448E-8 : f32
    %12 = vector.broadcast %cst_5 : f32 to vector<8x256xf32>
    %13 = arith.mulf %11, %12 : vector<8x256xf32>
    %14 = math.log %7 : vector<8x256xf32>
    %cst_6 = arith.constant -2.000000e+00 : f32
    %15 = vector.broadcast %cst_6 : f32 to vector<8x256xf32>
    %16 = arith.mulf %15, %14 : vector<8x256xf32>
    %17 = math.sqrt %16 : vector<8x256xf32>
    %cst_7 = arith.constant 6.28318548 : f32
    %18 = vector.broadcast %cst_7 : f32 to vector<8x256xf32>
    %19 = arith.mulf %18, %13 : vector<8x256xf32>
    %c0_8 = arith.constant 0 : index
    %20 = memref.load %arg1[%c0_8] : memref<1xf32, #tpu.memory_space<smem>>
    %cst_9 = arith.constant 0.333333343 : f32
    %21 = arith.mulf %20, %cst_9 : f32
    %22 = math.cos %19 : vector<8x256xf32>
    %23 = arith.mulf %17, %22 : vector<8x256xf32>
    %24 = vector.broadcast %21 : f32 to vector<8x256xf32>
    %25 = arith.mulf %23, %24 : vector<8x256xf32>
    %c0_10 = arith.constant 0 : index
    %c0_11 = arith.constant 0 : index
    %26 = vector.load %arg4[%c0_10, %c0_11] : memref<8x512xf32, #tpu.memory_space<vmem>>, vector<8x256xf32>
    tpu.vector_store %arg4[%c0_10, %c0_11], %25 {strides = array<i32>} : memref<8x512xf32, #tpu.memory_space<vmem>>, vector<8x256xf32>,
    %27 = math.sin %19 : vector<8x256xf32>
    %28 = arith.mulf %17, %27 : vector<8x256xf32>
    %29 = vector.broadcast %21 : f32 to vector<8x256xf32>
    %30 = arith.mulf %28, %29 : vector<8x256xf32>
    %c0_12 = arith.constant 0 : index
    %c256 = arith.constant 256 : index
    %31 = vector.load %arg4[%c0_12, %c256] : memref<8x512xf32, #tpu.memory_space<vmem>>, vector<8x256xf32>
    tpu.vector_store %arg4[%c0_12, %c256], %30 {strides = array<i32>} : memref<8x512xf32, #tpu.memory_space<vmem>>, vector<8x256xf32>,
    return
  }
  func.func @transform_0(%arg0: i32) -> i32 {
    %c0_i32 = arith.constant 0 : i32
    %c0_i32_0 = arith.constant 0 : i32
    return %c0_i32 : i32
  }
  func.func @transform_1(%arg0: i32) -> (i32, i32) {
    %c0_i32 = arith.constant 0 : i32
    %c0_i32_0 = arith.constant 0 : i32
    return %arg0, %c0_i32 : i32, i32
  }
  func.func @transform_2(%arg0: i32) -> (i32, i32) {
    %c0_i32 = arith.constant 0 : i32
    %c0_i32_0 = arith.constant 0 : i32
    return %arg0, %c0_i32 : i32, i32
  }
  func.func @transform_3(%arg0: i32) -> (i32, i32) {
    %c0_i32 = arith.constant 0 : i32
    %c0_i32_0 = arith.constant 0 : i32
    return %arg0, %c0_i32 : i32, i32
  }
}

</mosaic_0001>

<llo_original>
// kernel: tpu_custom_call.1
$region0: #{tpu_custom_call.1}
  #allocation0 [shape = 'u32[]', space=smem, size = 0x4, offset = 0x4, fixed_abs, tag = 'smem constant byte address 0x4 - core index']
  #allocation1 [shape = 'u32[144,128]{1,0:T(1,128)}', space=vmem, size = 0x12000, scoped, tag = 'internal scratch']
  #allocation2 [shape = 'f32[1]{0:T(128)S(6)}', space=smem, size = 0x200, scoped, tag = 'scoped memory for tpu_custom_call.1']
  %s0 = inlined_call_operand.<no memory space> [shape: f32[1], index: 0, kind: input, shape index: {}]
  %s1 = inlined_call_operand.hbm [shape: u32[8,256], index: 1, kind: input, shape index: {}]
  %s2 = inlined_call_operand.hbm [shape: u32[8,256], index: 2, kind: input, shape index: {}]
  %s3 = inlined_call_operand.hbm [shape: f32[8,512], index: 3, kind: output, shape index: {}]
  %s4 = sld [smem:[#allocation0]]
  $region30: #{tpu_custom_call.1} parent=0
    _
  %s6 = ssub.s32 1, %s4
  %s7 = scalar_select 0, %s6, %s4
  %8 = sst [smem:[#allocation2]] %s0
  $region1: #{tpu_custom_call.1} parent=0
    #allocation3 [shape = 'u8[8192]{0}', space=vmem, size = 0x2000, scoped, tag = 'input window, operand 1, single buffered']
    #allocation4 [shape = 's32[1]{0}', space=sflag, size = 0x4, scoped, tag = 'scoped memory for tpu_custom_call.1']
    #allocation5 [shape = 's32[1]{0}', space=sflag, size = 0x4, scoped, tag = 'scoped memory for tpu_custom_call.1']
    #allocation6 [shape = 'u8[8192]{0}', space=vmem, size = 0x2000, scoped, tag = 'input window, operand 2, single buffered']
    #allocation7 [shape = 's32[1]{0}', space=sflag, size = 0x4, scoped, tag = 'scoped memory for tpu_custom_call.1']
    #allocation8 [shape = 'u8[16384]{0}', space=vmem, size = 0x4000, scoped, tag = 'output window, operand 0, single buffered']
    %9 = vsyncpa [#allocation4], 0
    %10 = vsyncpa [#allocation7], 0
    %11 = vsyncpa [#allocation5], 0
    // Predicated region
    $region2: #{tpu_custom_call.1} parent=1 // pred_check
      _
    $region3: #{tpu_custom_call.1} parent=1 // pred_check_branch
      %13 = sbr.rel (0) target = $region5
    $region4: #{tpu_custom_call.1} parent=1 // pred_region
      _
    $region5: #{tpu_custom_call.1} parent=1 // pred_fallthru
      _
    // Predicated region
    $region6: #{tpu_custom_call.1} parent=1 // pred_check
      _
    $region7: #{tpu_custom_call.1} parent=1 // pred_check_branch
      %15 = sbr.rel (0) target = $region9
    $region8: #{tpu_custom_call.1} parent=1 // pred_region
      %s17 = ssub.s32 256, 256
      %18 = vsyncadd [#allocation4], %s17
      %s20 = sshll.u32 [#allocation3], 4
      %s21 = int_to_ptr.vmem [resolvable:$true] %s20
      %23 = dma.hbm_to_vmem [thread:$0]  %s1, 256, %s21, [#allocation4]
    $region9: #{tpu_custom_call.1} parent=1 // pred_fallthru
      _
    // Predicated region
    $region10: #{tpu_custom_call.1} parent=1 // pred_check
      _
    $region11: #{tpu_custom_call.1} parent=1 // pred_check_branch
      %25 = sbr.rel (0) target = $region13
    $region12: #{tpu_custom_call.1} parent=1 // pred_region
      %s27 = ssub.s32 256, 256
      %28 = vsyncadd [#allocation7], %s27
      %s30 = sshll.u32 [#allocation6], 4
      %s31 = int_to_ptr.vmem [resolvable:$true] %s30
      %33 = dma.hbm_to_vmem [thread:$0]  %s2, 256, %s31, [#allocation7]
    $region13: #{tpu_custom_call.1} parent=1 // pred_fallthru
      _
    // Predicated region
    $region14: #{tpu_custom_call.1} parent=1 // pred_check
      _
    $region15: #{tpu_custom_call.1} parent=1 // pred_check_branch
      %35 = sbr.rel (0) target = $region17
    $region16: #{tpu_custom_call.1} parent=1 // pred_region
      %36 = dma.done [#allocation4], 256
    $region17: #{tpu_custom_call.1} parent=1 // pred_fallthru
      _
    // Predicated region
    $region18: #{tpu_custom_call.1} parent=1 // pred_check
      _
    $region19: #{tpu_custom_call.1} parent=1 // pred_check_branch
      %38 = sbr.rel (0) target = $region21
    $region20: #{tpu_custom_call.1} parent=1 // pred_region
      %39 = dma.done [#allocation7], 256
    $region21: #{tpu_custom_call.1} parent=1 // pred_fallthru
      _
    %v40 = vld [vmem:[#allocation3] sm:$0xff]
    %v41 = vld [vmem:[#allocation3 + $0x8] sm:$0xff]
    %v42 = vshrl.u32 %v40, 8
    %v43 = vshrl.u32 %v41, 8
    %v44 = vshrl.u32 %v42, 16
    %v45 = vand.u32 %v42, 65535
    %v46 = vcvt.s32.f32 %v44
    %v47 = vmul.f32 %v46, 65536.0
    %v48 = vcvt.s32.f32 %v45
    %v49 = vadd.f32 %v47, %v48
    %v50 = vshrl.u32 %v43, 16
    %v51 = vand.u32 %v43, 65535
    %v52 = vcvt.s32.f32 %v50
    %v53 = vmul.f32 %v52, 65536.0
    %v54 = vcvt.s32.f32 %v51
    %v55 = vadd.f32 %v53, %v54
    %v56 = vmul.f32 %v49, 5.9604645e-08
    %v57 = vmul.f32 %v55, 5.9604645e-08
    %v58 = vsub.f32 1.0, %v56
    %v59 = vsub.f32 1.0, %v57
    %v60 = vld [vmem:[#allocation6] sm:$0xff]
    %v61 = vld [vmem:[#allocation6 + $0x8] sm:$0xff]
    %v62 = vshrl.u32 %v60, 8
    %v63 = vshrl.u32 %v61, 8
    %v64 = vshrl.u32 %v62, 16
    %v65 = vand.u32 %v62, 65535
    %v66 = vcvt.s32.f32 %v64
    %v67 = vmul.f32 %v66, 65536.0
    %v68 = vcvt.s32.f32 %v65
    %v69 = vadd.f32 %v67, %v68
    %v70 = vshrl.u32 %v63, 16
    %v71 = vand.u32 %v63, 65535
    %v72 = vcvt.s32.f32 %v70
    %v73 = vmul.f32 %v72, 65536.0
    %v74 = vcvt.s32.f32 %v71
    %v75 = vadd.f32 %v73, %v74
    %v76 = vmul.f32 %v69, 5.9604645e-08
    %v77 = vmul.f32 %v75, 5.9604645e-08
    %v78 = vlog2.pop %v58
    %v79 = vmul.f32 %v78, 0.6931472
    %v80 = vlog2.pop %v59
    %v81 = vmul.f32 %v80, 0.6931472
    %v82 = vmul.f32 %v79, -2.0
    %v83 = vmul.f32 %v81, -2.0
    %v84 = vrsqrt.pop %v82
    %v85 = vmul.f32 %v82, %v84
    %vm86 = vcmp.eq.f32.partialorder %v82, inf
    %v87 = vsel %vm86, %v82, %v85
    %vm88 = vcmp.eq.f32.partialorder %v82, 0.0
    %v89 = vand.u32 %v82, 2147483648
    %v90 = vsel %vm88, %v89, %v87
    %v91 = vrsqrt.pop %v83
    %v92 = vmul.f32 %v83, %v91
    %vm93 = vcmp.eq.f32.partialorder %v83, inf
    %v94 = vsel %vm93, %v83, %v92
    %vm95 = vcmp.eq.f32.partialorder %v83, 0.0
    %v96 = vand.u32 %v83, 2147483648
    %v97 = vsel %vm95, %v96, %v94
    %v98 = vmul.f32 %v76, 6.2831855
    %v99 = vmul.f32 %v77, 6.2831855
    %s100 = sld [smem:[#allocation2]]
    %s101 = smul.f32 %s100, 0.33333334
    %v102 = vand.u32 2147483647, %v98
    %vm103 = vcmp.le.f32.partialorder %v102, 0.7853982
    %vm104 = vcmp.lt.s32.totalorder %v98, 0
    %v105 = vand.u32 %v98, 2139095040
    %v106 = vshrl.u32 %v105, 23
    %v107 = vsub.s32 %v106, 127
    %v108 = vand.u32 2147483647, %v98
    %v109 = vand.u32 %v108, 8388607
    %v110 = vor.u32 %v109, 8388608
    %v111 = vsub.s32 0, %v110
    %v112 = vadd.s32 %v107, 1
    %vm113 = vcmp.gt.s32.totalorder %v112, 0
    %v114 = vsel %vm113, %v112, 0
    %v115 = vshrl.u32 %v114, 5
    %v116 = vand.u32 %v114, 31
    %v117 = vsub.s32 32, %v116
    %v118 = vshrl.u32 683565275, %v117
    %v119 = vshll.u32 683565275, %v116
    %v120 = vshrl.u32 2475754826, %v117
    %v121 = vor.u32 %v119, %v120
    %v122 = vshll.u32 2475754826, %v116
    %v123 = vshrl.u32 2131351028, %v117
    %v124 = vor.u32 %v122, %v123
    %v125 = vshll.u32 2131351028, %v116
    %v126 = vshrl.u32 2102212464, %v117
    %v127 = vor.u32 %v125, %v126
    %v128 = vshll.u32 2102212464, %v116
    %v129 = vshrl.u32 920167782, %v117
    %v130 = vor.u32 %v128, %v129
    %v131 = vshll.u32 920167782, %v116
    %v132 = vshrl.u32 1326507024, %v117
    %v133 = vor.u32 %v131, %v132
    %vm134 = vcmp.lt.s32.totalorder %v115, 1
    %vm135 = vcmp.lt.s32.totalorder %v115, 2
    %vm136 = vcmp.lt.s32.totalorder %v115, 3
    %vm137 = vcmp.lt.s32.totalorder %v115, 4
    %v138 = vsel %vm134, %v118, %v121
    %v139 = vsel %vm137, %v127, 2102212464
    %v140 = vsel %vm136, %v124, %v139
    %v141 = vsel %vm135, %v138, %v140
    %v142 = vsel %vm134, %v121, %v124
    %v143 = vsel %vm137, %v130, 920167782
    %v144 = vsel %vm136, %v127, %v143
    %v145 = vsel %vm135, %v142, %v144
    %v146 = vsel %vm134, %v124, %v127
    %v147 = vsel %vm137, %v133, 1326507024
    %v148 = vsel %vm136, %v130, %v147
    %v149 = vsel %vm135, %v146, %v148
    %v150 = vshll.u32 %v110, 8
    %v151 = vmul.u32.u64.compose %v150, %v149
    %v152 = vextract.low.u32 %v151
    %v153 = vextract.high.u32 %v151
    %v154 = vmul.u32.u64.compose %v150, %v145
    %v155 = vextract.low.u32 %v154
    %v156 = vextract.high.u32 %v154
    %v157 = vmul.u32 %v150, %v141
    %v158 = vadd.s32 %v153, %v155
    %vm159 = vc.u32 %v153, %v155
    %v160 = vadd.s32 %v156, 1
    %v161 = vsel %vm159, %v160, %v156
    %v162 = vadd.s32 %v157, %v161
    %v163 = vadd.s32 %v162, 536870912
    %v164 = vshrl.u32 %v163, 30
    %v165 = vshll.u32 %v164, 30
    %v166 = vsub.s32 %v162, %v165
    %vm167 = vcmp.lt.s32.totalorder %v166, 0
    %v168 = vsub.s32 0, %v166
    %v169 = vsel %vm167, %v168, %v166
    %v170 = vclz %v169
    %v171 = vsub.s32 %v170, 2
    %vm172 = vcmp.gt.s32.totalorder 0, %v171
    %v173 = vsel %vm172, 0, %v171
    %v174 = vsub.s32 32, %v173
    %v175 = vshll.u32 %v166, %v173
    %v176 = vshrl.u32 %v158, %v174
    %v177 = vor.u32 %v175, %v176
    %v178 = vsub.s32 4294967266, %v173
    %v179 = vadd.s32 %v178, 127
    %v180 = vshll.u32 %v179, 23
    %v181 = vor.u32 4788187, %v180
    %v182 = vand.u32 2147483647, %v181
    %v184 = vcvt.s32.f32 %v177
    %v185 = vmul.f32 %v184, %v182
    %v186 = vxor.u32 %v185, 2147483648
    %v187 = vsel %vm104, %v186, %v185
    %v188 = vsub.s32 4, %v164
    %v189 = vsel %vm104, %v188, %v164
    %v190 = vsel %vm103, %v98, %v187
    %v191 = vsel %vm103, 0, %v189
    %v192 = vcosq.f32.pop %v190
    %v193 = vsinq.f32.pop %v190
    %vm194 = vweird.f32 %v98
    %v195 = vand.u32 %v191, 3
    %vm196 = vcmp.lt.s32.totalorder %v195, 2
    %vm197 = vcmp.eq.s32.totalorder %v195, 0
    %v198 = vxor.u32 %v193, 2147483648
    %v199 = vsel %vm197, %v192, %v198
    %vm200 = vcmp.eq.s32.totalorder %v195, 2
    %v201 = vxor.u32 %v192, 2147483648
    %v202 = vsel %vm200, %v201, %v193
    %v203 = vsel %vm196, %v199, %v202
    %v204 = vsel %vm194, nan, %v203
    %v205 = vand.u32 2147483647, %v99
    %vm206 = vcmp.le.f32.partialorder %v205, 0.7853982
    %vm207 = vcmp.lt.s32.totalorder %v99, 0
    %v208 = vand.u32 %v99, 2139095040
    %v209 = vshrl.u32 %v208, 23
    %v210 = vsub.s32 %v209, 127
    %v211 = vand.u32 2147483647, %v99
    %v212 = vand.u32 %v211, 8388607
    %v213 = vor.u32 %v212, 8388608
    %v214 = vsub.s32 0, %v213
    %v215 = vadd.s32 %v210, 1
    %vm216 = vcmp.gt.s32.totalorder %v215, 0
    %v217 = vsel %vm216, %v215, 0
    %v218 = vshrl.u32 %v217, 5
    %v219 = vand.u32 %v217, 31
    %v220 = vsub.s32 32, %v219
    %v221 = vshrl.u32 683565275, %v220
    %v222 = vshll.u32 683565275, %v219
    %v223 = vshrl.u32 2475754826, %v220
    %v224 = vor.u32 %v222, %v223
    %v225 = vshll.u32 2475754826, %v219
    %v226 = vshrl.u32 2131351028, %v220
    %v227 = vor.u32 %v225, %v226
    %v228 = vshll.u32 2131351028, %v219
    %v229 = vshrl.u32 2102212464, %v220
    %v230 = vor.u32 %v228, %v229
    %v231 = vshll.u32 2102212464, %v219
    %v232 = vshrl.u32 920167782, %v220
    %v233 = vor.u32 %v231, %v232
    %v234 = vshll.u32 920167782, %v219
    %v235 = vshrl.u32 1326507024, %v220
    %v236 = vor.u32 %v234, %v235
    %vm237 = vcmp.lt.s32.totalorder %v218, 1
    %vm238 = vcmp.lt.s32.totalorder %v218, 2
    %vm239 = vcmp.lt.s32.totalorder %v218, 3
    %vm240 = vcmp.lt.s32.totalorder %v218, 4
    %v241 = vsel %vm237, %v221, %v224
    %v242 = vsel %vm240, %v230, 2102212464
    %v243 = vsel %vm239, %v227, %v242
    %v244 = vsel %vm238, %v241, %v243
    %v245 = vsel %vm237, %v224, %v227
    %v246 = vsel %vm240, %v233, 920167782
    %v247 = vsel %vm239, %v230, %v246
    %v248 = vsel %vm238, %v245, %v247
    %v249 = vsel %vm237, %v227, %v230
    %v250 = vsel %vm240, %v236, 1326507024
    %v251 = vsel %vm239, %v233, %v250
    %v252 = vsel %vm238, %v249, %v251
    %v253 = vshll.u32 %v213, 8
    %v254 = vmul.u32.u64.compose %v253, %v252
    %v255 = vextract.low.u32 %v254
    %v256 = vextract.high.u32 %v254
    %v257 = vmul.u32.u64.compose %v253, %v248
    %v258 = vextract.low.u32 %v257
    %v259 = vextract.high.u32 %v257
    %v260 = vmul.u32 %v253, %v244
    %v261 = vadd.s32 %v256, %v258
    %vm262 = vc.u32 %v256, %v258
    %v263 = vadd.s32 %v259, 1
    %v264 = vsel %vm262, %v263, %v259
    %v265 = vadd.s32 %v260, %v264
    %v266 = vadd.s32 %v265, 536870912
    %v267 = vshrl.u32 %v266, 30
    %v268 = vshll.u32 %v267, 30
    %v269 = vsub.s32 %v265, %v268
    %vm270 = vcmp.lt.s32.totalorder %v269, 0
    %v271 = vsub.s32 0, %v269
    %v272 = vsel %vm270, %v271, %v269
    %v273 = vclz %v272
    %v274 = vsub.s32 %v273, 2
    %vm275 = vcmp.gt.s32.totalorder 0, %v274
    %v276 = vsel %vm275, 0, %v274
    %v277 = vsub.s32 32, %v276
    %v278 = vshll.u32 %v269, %v276
    %v279 = vshrl.u32 %v261, %v277
    %v280 = vor.u32 %v278, %v279
    %v281 = vsub.s32 4294967266, %v276
    %v282 = vadd.s32 %v281, 127
    %v283 = vshll.u32 %v282, 23
    %v284 = vor.u32 4788187, %v283
    %v285 = vand.u32 2147483647, %v284
    %v287 = vcvt.s32.f32 %v280
    %v288 = vmul.f32 %v287, %v285
    %v289 = vxor.u32 %v288, 2147483648
    %v290 = vsel %vm207, %v289, %v288
    %v291 = vsub.s32 4, %v267
    %v292 = vsel %vm207, %v291, %v267
    %v293 = vsel %vm206, %v99, %v290
    %v294 = vsel %vm206, 0, %v292
    %v295 = vcosq.f32.pop %v293
    %v296 = vsinq.f32.pop %v293
    %vm297 = vweird.f32 %v99
    %v298 = vand.u32 %v294, 3
    %vm299 = vcmp.lt.s32.totalorder %v298, 2
    %vm300 = vcmp.eq.s32.totalorder %v298, 0
    %v301 = vxor.u32 %v296, 2147483648
    %v302 = vsel %vm300, %v295, %v301
    %vm303 = vcmp.eq.s32.totalorder %v298, 2
    %v304 = vxor.u32 %v295, 2147483648
    %v305 = vsel %vm303, %v304, %v296
    %v306 = vsel %vm299, %v302, %v305
    %v307 = vsel %vm297, nan, %v306
    %v308 = vmul.f32 %v90, %v204
    %v309 = vmul.f32 %v97, %v307
    %v310 = vstv %s101
    %v311 = vmul.f32 %v308, %v310
    %v312 = vmul.f32 %v309, %v310
    %313 = vst [vmem:[#allocation8] sm:$0xff] %v311
    %314 = vst [vmem:[#allocation8 + $0x8] sm:$0xff] %v312
    %v315 = vand.u32 2147483647, %v98
    %vm316 = vcmp.le.f32.partialorder %v315, 0.7853982
    %vm317 = vcmp.lt.s32.totalorder %v98, 0
    %v318 = vand.u32 %v98, 2139095040
    %v319 = vshrl.u32 %v318, 23
    %v320 = vsub.s32 %v319, 127
    %v321 = vand.u32 2147483647, %v98
    %v322 = vand.u32 %v321, 8388607
    %v323 = vor.u32 %v322, 8388608
    %v324 = vsub.s32 0, %v323
    %v325 = vadd.s32 %v320, 1
    %vm326 = vcmp.gt.s32.totalorder %v325, 0
    %v327 = vsel %vm326, %v325, 0
    %v328 = vshrl.u32 %v327, 5
    %v329 = vand.u32 %v327, 31
    %v330 = vsub.s32 32, %v329
    %v331 = vshrl.u32 683565275, %v330
    %v332 = vshll.u32 683565275, %v329
    %v333 = vshrl.u32 2475754826, %v330
    %v334 = vor.u32 %v332, %v333
    %v335 = vshll.u32 2475754826, %v329
    %v336 = vshrl.u32 2131351028, %v330
    %v337 = vor.u32 %v335, %v336
    %v338 = vshll.u32 2131351028, %v329
    %v339 = vshrl.u32 2102212464, %v330
    %v340 = vor.u32 %v338, %v339
    %v341 = vshll.u32 2102212464, %v329
    %v342 = vshrl.u32 920167782, %v330
    %v343 = vor.u32 %v341, %v342
    %v344 = vshll.u32 920167782, %v329
    %v345 = vshrl.u32 1326507024, %v330
    %v346 = vor.u32 %v344, %v345
    %vm347 = vcmp.lt.s32.totalorder %v328, 1
    %vm348 = vcmp.lt.s32.totalorder %v328, 2
    %vm349 = vcmp.lt.s32.totalorder %v328, 3
    %vm350 = vcmp.lt.s32.totalorder %v328, 4
    %v351 = vsel %vm347, %v331, %v334
    %v352 = vsel %vm350, %v340, 2102212464
    %v353 = vsel %vm349, %v337, %v352
    %v354 = vsel %vm348, %v351, %v353
    %v355 = vsel %vm347, %v334, %v337
    %v356 = vsel %vm350, %v343, 920167782
    %v357 = vsel %vm349, %v340, %v356
    %v358 = vsel %vm348, %v355, %v357
    %v359 = vsel %vm347, %v337, %v340
    %v360 = vsel %vm350, %v346, 1326507024
    %v361 = vsel %vm349, %v343, %v360
    %v362 = vsel %vm348, %v359, %v361
    %v363 = vshll.u32 %v323, 8
    %v364 = vmul.u32.u64.compose %v363, %v362
    %v365 = vextract.low.u32 %v364
    %v366 = vextract.high.u32 %v364
    %v367 = vmul.u32.u64.compose %v363, %v358
    %v368 = vextract.low.u32 %v367
    %v369 = vextract.high.u32 %v367
    %v370 = vmul.u32 %v363, %v354
    %v371 = vadd.s32 %v366, %v368
    %vm372 = vc.u32 %v366, %v368
    %v373 = vadd.s32 %v369, 1
    %v374 = vsel %vm372, %v373, %v369
    %v375 = vadd.s32 %v370, %v374
    %v376 = vadd.s32 %v375, 536870912
    %v377 = vshrl.u32 %v376, 30
    %v378 = vshll.u32 %v377, 30
    %v379 = vsub.s32 %v375, %v378
    %vm380 = vcmp.lt.s32.totalorder %v379, 0
    %v381 = vsub.s32 0, %v379
    %v382 = vsel %vm380, %v381, %v379
    %v383 = vclz %v382
    %v384 = vsub.s32 %v383, 2
    %vm385 = vcmp.gt.s32.totalorder 0, %v384
    %v386 = vsel %vm385, 0, %v384
    %v387 = vsub.s32 32, %v386
    %v388 = vshll.u32 %v379, %v386
    %v389 = vshrl.u32 %v371, %v387
    %v390 = vor.u32 %v388, %v389
    %v391 = vsub.s32 4294967266, %v386
    %v392 = vadd.s32 %v391, 127
    %v393 = vshll.u32 %v392, 23
    %v394 = vor.u32 4788187, %v393
    %v395 = vand.u32 2147483647, %v394
    %v397 = vcvt.s32.f32 %v390
    %v398 = vmul.f32 %v397, %v395
    %v399 = vxor.u32 %v398, 2147483648
    %v400 = vsel %vm317, %v399, %v398
    %v401 = vsub.s32 4, %v377
    %v402 = vsel %vm317, %v401, %v377
    %v403 = vsel %vm316, %v98, %v400
    %v404 = vsel %vm316, 0, %v402
    %v405 = vcosq.f32.pop %v403
    %v406 = vsinq.f32.pop %v403
    %vm407 = vweird.f32 %v98
    %v408 = vadd.s32 %v404, 3
    %v409 = vand.u32 %v408, 3
    %vm410 = vcmp.lt.s32.totalorder %v409, 2
    %vm411 = vcmp.eq.s32.totalorder %v409, 0
    %v412 = vxor.u32 %v406, 2147483648
    %v413 = vsel %vm411, %v405, %v412
    %vm414 = vcmp.eq.s32.totalorder %v409, 2
    %v415 = vxor.u32 %v405, 2147483648
    %v416 = vsel %vm414, %v415, %v406
    %v417 = vsel %vm410, %v413, %v416
    %v418 = vsel %vm407, nan, %v417
    %v419 = vand.u32 2147483647, %v99
    %vm420 = vcmp.le.f32.partialorder %v419, 0.7853982
    %vm421 = vcmp.lt.s32.totalorder %v99, 0
    %v422 = vand.u32 %v99, 2139095040
    %v423 = vshrl.u32 %v422, 23
    %v424 = vsub.s32 %v423, 127
    %v425 = vand.u32 2147483647, %v99
    %v426 = vand.u32 %v425, 8388607
    %v427 = vor.u32 %v426, 8388608
    %v428 = vsub.s32 0, %v427
    %v429 = vadd.s32 %v424, 1
    %vm430 = vcmp.gt.s32.totalorder %v429, 0
    %v431 = vsel %vm430, %v429, 0
    %v432 = vshrl.u32 %v431, 5
    %v433 = vand.u32 %v431, 31
    %v434 = vsub.s32 32, %v433
    %v435 = vshrl.u32 683565275, %v434
    %v436 = vshll.u32 683565275, %v433
    %v437 = vshrl.u32 2475754826, %v434
    %v438 = vor.u32 %v436, %v437
    %v439 = vshll.u32 2475754826, %v433
    %v440 = vshrl.u32 2131351028, %v434
    %v441 = vor.u32 %v439, %v440
    %v442 = vshll.u32 2131351028, %v433
    %v443 = vshrl.u32 2102212464, %v434
    %v444 = vor.u32 %v442, %v443
    %v445 = vshll.u32 2102212464, %v433
    %v446 = vshrl.u32 920167782, %v434
    %v447 = vor.u32 %v445, %v446
    %v448 = vshll.u32 920167782, %v433
    %v449 = vshrl.u32 1326507024, %v434
    %v450 = vor.u32 %v448, %v449
    %vm451 = vcmp.lt.s32.totalorder %v432, 1
    %vm452 = vcmp.lt.s32.totalorder %v432, 2
    %vm453 = vcmp.lt.s32.totalorder %v432, 3
    %vm454 = vcmp.lt.s32.totalorder %v432, 4
    %v455 = vsel %vm451, %v435, %v438
    %v456 = vsel %vm454, %v444, 2102212464
    %v457 = vsel %vm453, %v441, %v456
    %v458 = vsel %vm452, %v455, %v457
    %v459 = vsel %vm451, %v438, %v441
    %v460 = vsel %vm454, %v447, 920167782
    %v461 = vsel %vm453, %v444, %v460
    %v462 = vsel %vm452, %v459, %v461
    %v463 = vsel %vm451, %v441, %v444
    %v464 = vsel %vm454, %v450, 1326507024
    %v465 = vsel %vm453, %v447, %v464
    %v466 = vsel %vm452, %v463, %v465
    %v467 = vshll.u32 %v427, 8
    %v468 = vmul.u32.u64.compose %v467, %v466
    %v469 = vextract.low.u32 %v468
    %v470 = vextract.high.u32 %v468
    %v471 = vmul.u32.u64.compose %v467, %v462
    %v472 = vextract.low.u32 %v471
    %v473 = vextract.high.u32 %v471
    %v474 = vmul.u32 %v467, %v458
    %v475 = vadd.s32 %v470, %v472
    %vm476 = vc.u32 %v470, %v472
    %v477 = vadd.s32 %v473, 1
    %v478 = vsel %vm476, %v477, %v473
    %v479 = vadd.s32 %v474, %v478
    %v480 = vadd.s32 %v479, 536870912
    %v481 = vshrl.u32 %v480, 30
    %v482 = vshll.u32 %v481, 30
    %v483 = vsub.s32 %v479, %v482
    %vm484 = vcmp.lt.s32.totalorder %v483, 0
    %v485 = vsub.s32 0, %v483
    %v486 = vsel %vm484, %v485, %v483
    %v487 = vclz %v486
    %v488 = vsub.s32 %v487, 2
    %vm489 = vcmp.gt.s32.totalorder 0, %v488
    %v490 = vsel %vm489, 0, %v488
    %v491 = vsub.s32 32, %v490
    %v492 = vshll.u32 %v483, %v490
    %v493 = vshrl.u32 %v475, %v491
    %v494 = vor.u32 %v492, %v493
    %v495 = vsub.s32 4294967266, %v490
    %v496 = vadd.s32 %v495, 127
    %v497 = vshll.u32 %v496, 23
    %v498 = vor.u32 4788187, %v497
    %v499 = vand.u32 2147483647, %v498
    %v501 = vcvt.s32.f32 %v494
    %v502 = vmul.f32 %v501, %v499
    %v503 = vxor.u32 %v502, 2147483648
    %v504 = vsel %vm421, %v503, %v502
    %v505 = vsub.s32 4, %v481
    %v506 = vsel %vm421, %v505, %v481
    %v507 = vsel %vm420, %v99, %v504
    %v508 = vsel %vm420, 0, %v506
    %v509 = vcosq.f32.pop %v507
    %v510 = vsinq.f32.pop %v507
    %vm511 = vweird.f32 %v99
    %v512 = vadd.s32 %v508, 3
    %v513 = vand.u32 %v512, 3
    %vm514 = vcmp.lt.s32.totalorder %v513, 2
    %vm515 = vcmp.eq.s32.totalorder %v513, 0
    %v516 = vxor.u32 %v510, 2147483648
    %v517 = vsel %vm515, %v509, %v516
    %vm518 = vcmp.eq.s32.totalorder %v513, 2
    %v519 = vxor.u32 %v509, 2147483648
    %v520 = vsel %vm518, %v519, %v510
    %v521 = vsel %vm514, %v517, %v520
    %v522 = vsel %vm511, nan, %v521
    %v523 = vmul.f32 %v90, %v418
    %v524 = vmul.f32 %v97, %v522
    %v525 = vmul.f32 %v523, %v310
    %v526 = vmul.f32 %v524, %v310
    %527 = vst [vmem:[#allocation8 + $0x10] sm:$0xff] %v525
    %528 = vst [vmem:[#allocation8 + $0x18] sm:$0xff] %v526
    // Predicated region
    $region22: #{tpu_custom_call.1} parent=1 // pred_check
      _
    $region23: #{tpu_custom_call.1} parent=1 // pred_check_branch
      %530 = sbr.rel (0) target = $region25
    $region24: #{tpu_custom_call.1} parent=1 // pred_region
      %s532 = ssub.s32 512, 512
      %533 = vsyncadd [#allocation5], %s532
      %s535 = sshll.u32 [#allocation8], 4
      %s536 = int_to_ptr.vmem [resolvable:$true] %s535
      %538 = dma.vmem_to_hbm [thread:$0]  %s536, 512, %s3, [#allocation5]
    $region25: #{tpu_custom_call.1} parent=1 // pred_fallthru
      _
    // Predicated region
    $region26: #{tpu_custom_call.1} parent=1 // pred_check
      _
    $region27: #{tpu_custom_call.1} parent=1 // pred_check_branch
      %540 = sbr.rel (0) target = $region29
    $region28: #{tpu_custom_call.1} parent=1 // pred_region
      %541 = dma.done [#allocation5], 512
    $region29: #{tpu_custom_call.1} parent=1 // pred_fallthru
      _
    %542 = vsyncpa [#allocation4], 1
    %543 = vsyncpa [#allocation7], 1
    %544 = vsyncpa [#allocation5], 1

</llo_original>
